<compile_context>
chip_gen: v6e
topology: v6e:2x2x1
jax: 0.10.0
libtpu: 0.0.40
codegen_flags: <defaults>
</compile_context>

<pallas_src>
import functools

import jax
import jax.numpy as jnp
from jax.experimental import pallas as pl
from jax.experimental.pallas import tpu as pltpu


def _round_up(x, m):
    return ((x + m - 1) // m) * m


# ---------------------------------------------------------------------------
# Fused kernel: one (batch block, time chunk) of the RNN.
#   x_ref     : (1, T_blk*B_blk, I)    chunk inputs, rows are t-major (row = t*B_blk + j)
#   h0_ref    : (B_blk, F_pad)         initial hidden (used on chunk 0)
#   wx_ref    : (I, F_pad)             fused [W_xh | W_xo | 0]   (VMEM resident)
#   b_ref     : (1, F_pad)             fused [b_h  | b_o  | 0]
#   wh_ref    : (F_pad, F_pad)         fused [W_hh | W_ho | 0]   (VMEM resident)
#   out_ref   : (T_blk, B_blk, F_pad)  log_softmax lives in columns [H, H+O)
#   hfin_ref  : (B_blk, F_pad)         hidden carry / final hidden (resident over chunks)
#   xproj_ref : (T_blk*B_blk, F_pad)   VMEM scratch: x @ W_x + b for the chunk
# ---------------------------------------------------------------------------
def fused_rnn_kernel(x_ref, h0_ref, wx_ref, b_ref, wh_ref,
                     out_ref, hfin_ref, xproj_ref, *,
                     t_total, t_blk, b_blk, hidden_size, output_size):
    c = pl.program_id(1)

    # Initialize the hidden carry from h0 on the first time chunk.
    @pl.when(c == 0)
    def _():
        hfin_ref[...] = h0_ref[...]

    # ---- 1) input projection for the whole chunk: one parallel MXU matmul ----
    xproj_ref[...] = (
        jnp.dot(x_ref[0], wx_ref[...], preferred_element_type=jnp.float32)
        + b_ref[...])

    wh = wh_ref[...]
    mm_dtype = wh.dtype

    # ---- 2) serial recurrence: only matmul + tanh on the critical path ----
    def step(t, h):
        row = pl.multiple_of(t * b_blk, b_blk)
        pre = xproj_ref[pl.ds(row, b_blk), :] + jnp.dot(
            h.astype(mm_dtype), wh, preferred_element_type=jnp.float32)
        out_ref[t] = pre                        # raw pre-activation; softmax below
        h_new = jnp.tanh(pre)
        if t_total % t_blk != 0:                # trace-time check: ragged last chunk
            keep = ((c * t_blk + t) < t_total).astype(h_new.dtype)
            h_new = h + keep * (h_new - h)      # padded steps must not move the carry
        return h_new

    h_fin = jax.lax.fori_loop(0, t_blk, step, hfin_ref[...],
                              unroll=(True if t_blk <= 16 else 8))
    hfin_ref[...] = h_fin

    # ---- 3) masked log_softmax over output lanes [H, H+O), vectorized over chunk ----
    pre_all = out_ref[...]                                      # (T_blk, B_blk, F_pad)
    col = jax.lax.broadcasted_iota(jnp.int32, pre_all.shape, 2)
    valid = (col >= hidden_size) & (col < hidden_size + output_size)
    masked = jnp.where(valid, pre_all, -jnp.inf)
    m = jnp.max(masked, axis=2, keepdims=True)
    sumexp = jnp.sum(jnp.exp(masked - m), axis=2, keepdims=True)
    out_ref[...] = (pre_all - m) - jnp.log(sumexp)


# ---------------------------------------------------------------------------
# Fused sequence forward: applies the RNN cell to every timestep of x_seq.
# ---------------------------------------------------------------------------
@functools.partial(jax.jit, static_argnames=("matmul_dtype",))
def rnn_sequence_forward(x_seq, hidden, w_i2h, b_i2h, w_i2o, b_i2o,
                         matmul_dtype="bfloat16"):
    f32 = jnp.float32
    mm_dtype = jnp.bfloat16 if matmul_dtype == "bfloat16" else f32

    x_seq = x_seq.astype(f32)
    hidden = hidden.astype(f32)
    w_i2h, b_i2h = w_i2h.astype(f32), b_i2h.astype(f32)
    w_i2o, b_i2o = w_i2o.astype(f32), b_i2o.astype(f32)

    T, B, I = x_seq.shape
    H = w_i2h.shape[1]
    O = w_i2o.shape[1]
    F_pad = _round_up(H + O, 128)            # fused, lane-padded feature dim

    # ---- batch tiling: big sublane-aligned blocks; >=2 blocks when possible (v7x) ----
    B_al = _round_up(B, 8)
    B_blk = min(B_al, 128)
    if -(-B_al // B_blk) < 2 and B_blk >= 16:
        B_blk = _round_up(B_blk // 2, 8)
    B_pad = _round_up(B, B_blk)
    num_b = B_pad // B_blk

    # ---- time chunking: whole-chunk VMEM slabs bounded (~2048 rows of F_pad f32) ----
    T_blk = min(T, max(1, 2048 // B_blk))
    T_pad = _round_up(T, T_blk)
    num_tc = T_pad // T_blk

    # ---- fused / padded parameters (built once; cheap pad+scatter under jit) ----
    w_x_cat = jnp.zeros((I, F_pad), f32)
    w_x_cat = w_x_cat.at[:, :H].set(w_i2h[:I]).at[:, H:H + O].set(w_i2o[:I])
    w_h_cat = jnp.zeros((F_pad, F_pad), f32)
    w_h_cat = w_h_cat.at[:H, :H].set(w_i2h[I:]).at[:H, H:H + O].set(w_i2o[I:])
    b_cat = jnp.zeros((1, F_pad), f32)
    b_cat = b_cat.at[:, :H].set(b_i2h).at[:, H:H + O].set(b_i2o)
    w_x_cat = w_x_cat.astype(mm_dtype)
    w_h_cat = w_h_cat.astype(mm_dtype)

    # ---- padded activations, rearranged so each batch block is a contiguous slab ----
    x_pad = jnp.zeros((T_pad, B_pad, I), mm_dtype).at[:T, :B, :].set(
        x_seq.astype(mm_dtype))
    x_blk = (x_pad.reshape(T_pad, num_b, B_blk, I)
                  .transpose(1, 0, 2, 3)
                  .reshape(num_b, T_pad * B_blk, I))        # rows are t-major
    h0_pad = jnp.zeros((B_pad, F_pad), f32).at[:B, :H].set(hidden)

    kernel = functools.partial(
        fused_rnn_kernel, t_total=T, t_blk=T_blk, b_blk=B_blk,
        hidden_size=H, output_size=O)

    out_slab, h_fin = pl.pallas_call(
        kernel,
        out_shape=(
            jax.ShapeDtypeStruct((T_pad, B_pad, F_pad), f32),
            jax.ShapeDtypeStruct((B_pad, F_pad), f32),
        ),
        grid=(num_b, num_tc),
        in_specs=[
            pl.BlockSpec((1, T_blk * B_blk, I), lambda b, c: (b, c, 0)),  # x chunk
            pl.BlockSpec((B_blk, F_pad), lambda b, c: (b, 0)),            # h0
            pl.BlockSpec((I, F_pad), lambda b, c: (0, 0)),                # W_x (resident)
            pl.BlockSpec((1, F_pad), lambda b, c: (0, 0)),                # bias
            pl.BlockSpec((F_pad, F_pad), lambda b, c: (0, 0)),            # W_h (resident)
        ],
        out_specs=(
            pl.BlockSpec((T_blk, B_blk, F_pad), lambda b, c: (c, b, 0)),  # log_softmax
            pl.BlockSpec((B_blk, F_pad), lambda b, c: (b, 0)),            # hidden carry
        ),
        scratch_shapes=[pltpu.VMEM((T_blk * B_blk, F_pad), f32)],
        compiler_params=pltpu.CompilerParams(
            dimension_semantics=("parallel", "arbitrary"),
            vmem_limit_bytes=64 * 1024 * 1024),
    )(x_blk, h0_pad, w_x_cat, b_cat, w_h_cat)

    outputs = out_slab[:T, :B, H:H + O]      # strip time / batch / lane padding
    new_hidden = h_fin[:B, :H]
    return outputs, new_hidden


# Single-step forward matching RNN.forward(input, hidden) -> (output, hidden)
@functools.partial(jax.jit, static_argnames=("matmul_dtype",))
def rnn_forward(x, hidden, w_i2h, b_i2h, w_i2o, b_i2o, matmul_dtype="bfloat16"):
    out_seq, new_hidden = rnn_sequence_forward(
        x[None], hidden, w_i2h, b_i2h, w_i2o, b_i2o, matmul_dtype=matmul_dtype)
    return out_seq[0], new_hidden


def init_params(key, input_size, hidden_size, output_size):
    """Deterministic init mimicking nn.Linear (uniform +/- 1/sqrt(fan_in)).
    Weights stored transposed: (in_features, out_features)."""
    k1, k2, k3, k4 = jax.random.split(key, 4)
    fan_in = input_size + hidden_size
    bound = 1.0 / jnp.sqrt(float(fan_in))
    w_i2h = jax.random.uniform(k1, (fan_in, hidden_size), jnp.float32, -bound, bound)
    b_i2h = jax.random.uniform(k2, (1, hidden_size), jnp.float32, -bound, bound)
    w_i2o = jax.random.uniform(k3, (fan_in, output_size), jnp.float32, -bound, bound)
    b_i2o = jax.random.uniform(k4, (1, output_size), jnp.float32, -bound, bound)
    return w_i2h, b_i2h, w_i2o, b_i2o


if __name__ == "__main__":
    key = jax.random.PRNGKey(0)
    kx, kp = jax.random.split(key, 2)

    T = 8            # sequence length
    batch = 2
    input_size = 16  # e.g. one-hot char features
    hidden_size = 32
    output_size = 8

    x_seq = jax.random.normal(kx, (T, batch, input_size), jnp.float32)
    h0 = jnp.zeros((batch, hidden_size), jnp.float32)  # initHidden() per batch row

    w_i2h, b_i2h, w_i2o, b_i2o = init_params(kp, input_size, hidden_size, output_size)

    # plain-JAX reference (f32)
    def ref_step(x, h):
        combined = jnp.concatenate([x, h], axis=1)
        nh = jnp.tanh(combined @ w_i2h + b_i2h)
        out = jax.nn.log_softmax(combined @ w_i2o + b_i2o, axis=1)
        return out, nh

    ref_outs = []
    h = h0
    for t in range(T):
        o, h = ref_step(x_seq[t], h)
        ref_outs.append(o)
    ref_outs = jnp.stack(ref_outs)

    # f32-matmul path: exact module numerics
    outs32, hfin32 = rnn_sequence_forward(x_seq, h0, w_i2h, b_i2h, w_i2o, b_i2o,
                                          matmul_dtype="float32")
    jax.block_until_ready((outs32, hfin32))
    assert jnp.allclose(outs32, ref_outs, atol=1e-4), "f32 sequence output mismatch"
    assert jnp.allclose(hfin32, h, atol=1e-4), "f32 final hidden mismatch"

    # bf16-matmul path (MXU-native; f32 accumulation + f32 tanh/softmax)
    outs16, hfin16 = rnn_sequence_forward(x_seq, h0, w_i2h, b_i2h, w_i2o, b_i2o,
                                          matmul_dtype="bfloat16")
    jax.block_until_ready((outs16, hfin16))
    assert jnp.allclose(outs16, ref_outs, atol=5e-2), "bf16 sequence output mismatch"
    assert jnp.allclose(hfin16, h, atol=5e-2), "bf16 final hidden mismatch"

    # single-step API (original RNN.forward semantics; default bf16 matmuls)
    out0, h1 = rnn_forward(x_seq[0], h0, w_i2h, b_i2h, w_i2o, b_i2o)
    jax.block_until_ready((out0, h1))
    assert jnp.allclose(out0, ref_outs[0], atol=5e-2), "single-step output mismatch"
    assert jnp.allclose(
        h1, jnp.tanh(jnp.concatenate([x_seq[0], h0], axis=1) @ w_i2h + b_i2h),
        atol=5e-2), "single-step hidden mismatch"

    print("KERNEL_OK")
</pallas_src>

<mosaic_0001>
module attributes {stable_mosaic.version = 11 : i64} {
  func.func @fused_rnn_kernel(%arg0: i32, %arg1: i32, %arg2: memref<1x64x16xf32, #tpu.memory_space<vmem>>, %arg3: memref<8x128xf32, #tpu.memory_space<vmem>>, %arg4: memref<16x128xf32, #tpu.memory_space<vmem>>, %arg5: memref<1x128xf32, #tpu.memory_space<vmem>>, %arg6: memref<128x128xf32, #tpu.memory_space<vmem>>, %arg7: memref<8x8x128xf32, #tpu.memory_space<vmem>>, %arg8: memref<8x128xf32, #tpu.memory_space<vmem>>, %arg9: memref<64x128xf32, #tpu.memory_space<vmem>>) attributes {dimension_semantics = [#tpu.dimension_semantics<parallel>, #tpu.dimension_semantics<arbitrary>], iteration_bounds = array<i64: 1, 1>, scalar_prefetch = 0 : i64, scratch_operands = 1 : i64, tpu.core_type = #tpu.core_type<tc>, window_params = [{transform_indices = @transform_0, window_bounds = array<i64: 1, 64, 16>}, {transform_indices = @transform_1, window_bounds = array<i64: 8, 128>}, {pipeline_mode = #tpu.pipeline_mode<synchronous>, transform_indices = @transform_2, window_bounds = array<i64: 16, 128>}, {pipeline_mode = #tpu.pipeline_mode<synchronous>, transform_indices = @transform_3, window_bounds = array<i64: 1, 128>}, {pipeline_mode = #tpu.pipeline_mode<synchronous>, transform_indices = @transform_4, window_bounds = array<i64: 128, 128>}, {transform_indices = @transform_5, window_bounds = array<i64: 8, 8, 128>}, {transform_indices = @transform_6, window_bounds = array<i64: 8, 128>}]} {
    %c0_i32 = arith.constant 0 : i32
    %0 = arith.cmpi eq, %arg1, %c0_i32 : i32
    %1 = arith.extui %0 : i1 to i32
    %c0_i32_0 = arith.constant 0 : i32
    %2 = arith.cmpi ne, %1, %c0_i32_0 : i32
    scf.if %2 {
      %c0_65 = arith.constant 0 : index
      %c0_66 = arith.constant 0 : index
      %124 = vector.load %arg3[%c0_65, %c0_66] : memref<8x128xf32, #tpu.memory_space<vmem>>, vector<8x128xf32>
      %c0_67 = arith.constant 0 : index
      %c0_68 = arith.constant 0 : index
      %125 = vector.load %arg8[%c0_67, %c0_68] : memref<8x128xf32, #tpu.memory_space<vmem>>, vector<8x128xf32>
      tpu.vector_store %arg8[%c0_67, %c0_68], %124 {strides = array<i32>} : memref<8x128xf32, #tpu.memory_space<vmem>>, vector<8x128xf32>,
    } else {
    }
    %c0 = arith.constant 0 : index
    %c0_1 = arith.constant 0 : index
    %c0_2 = arith.constant 0 : index
    %3 = vector.load %arg2[%c0, %c0_1, %c0_2] : memref<1x64x16xf32, #tpu.memory_space<vmem>>, vector<1x64x16xf32>
    %4 = vector.shape_cast %3 : vector<1x64x16xf32> to vector<64x16xf32>
    %c0_3 = arith.constant 0 : index
    %c0_4 = arith.constant 0 : index
    %5 = vector.load %arg4[%c0_3, %c0_4] : memref<16x128xf32, #tpu.memory_space<vmem>>, vector<16x128xf32>
    %cst = arith.constant dense<0.000000e+00> : vector<64x128xf32>
    %6 = tpu.matmul %4, %5, %cst {dimension_numbers = #tpu.dot_dimension_numbers<[1], [0], [0], [1], [0, 0, 1, 1], [], []>} : vector<64x16xf32>, vector<16x128xf32>, vector<64x128xf32> -> vector<64x128xf32>
    %c0_5 = arith.constant 0 : index
    %c0_6 = arith.constant 0 : index
    %7 = vector.load %arg5[%c0_5, %c0_6] : memref<1x128xf32, #tpu.memory_space<vmem>>, vector<1x128xf32>
    %8 = vector.broadcast %7 : vector<1x128xf32> to vector<64x128xf32>
    %9 = arith.addf %6, %8 : vector<64x128xf32>
    %c0_7 = arith.constant 0 : index
    %c0_8 = arith.constant 0 : index
    %10 = vector.load %arg9[%c0_7, %c0_8] : memref<64x128xf32, #tpu.memory_space<vmem>>, vector<64x128xf32>
    tpu.vector_store %arg9[%c0_7, %c0_8], %9 {strides = array<i32>} : memref<64x128xf32, #tpu.memory_space<vmem>>, vector<64x128xf32>,
    %c0_9 = arith.constant 0 : index
    %c0_10 = arith.constant 0 : index
    %11 = vector.load %arg6[%c0_9, %c0_10] : memref<128x128xf32, #tpu.memory_space<vmem>>, vector<128x128xf32>
    %c0_11 = arith.constant 0 : index
    %c0_12 = arith.constant 0 : index
    %12 = vector.load %arg8[%c0_11, %c0_12] : memref<8x128xf32, #tpu.memory_space<vmem>>, vector<8x128xf32>
    %c0_i32_13 = arith.constant 0 : i32
    %c8_i32 = arith.constant 8 : i32
    %13 = arith.muli %c0_i32_13, %c8_i32 : i32
    %14 = tpu.assume_multiple %13, 8 : i32
    %15 = arith.index_cast %14 : i32 to index
    %c0_14 = arith.constant 0 : index
    %16 = vector.load %arg9[%15, %c0_14] : memref<64x128xf32, #tpu.memory_space<vmem>>, vector<8x128xf32>
    %cst_15 = arith.constant dense<0.000000e+00> : vector<8x128xf32>
    %17 = tpu.matmul %12, %11, %cst_15 {dimension_numbers = #tpu.dot_dimension_numbers<[1], [0], [0], [1], [0, 0, 1, 1], [], []>} : vector<8x128xf32>, vector<128x128xf32>, vector<8x128xf32> -> vector<8x128xf32>
    %18 = arith.addf %16, %17 : vector<8x128xf32>
    %19 = arith.index_cast %c0_i32_13 : i32 to index
    %c0_16 = arith.constant 0 : index
    %c0_17 = arith.constant 0 : index
    %20 = vector.load %arg7[%19, %c0_16, %c0_17] : memref<8x8x128xf32, #tpu.memory_space<vmem>>, vector<1x8x128xf32>
    %21 = vector.shape_cast %20 : vector<1x8x128xf32> to vector<8x128xf32>
    %22 = vector.shape_cast %18 : vector<8x128xf32> to vector<1x8x128xf32>
    tpu.vector_store %arg7[%19, %c0_16, %c0_17], %22 {strides = array<i32>} : memref<8x8x128xf32, #tpu.memory_space<vmem>>, vector<1x8x128xf32>,
    %23 = math.tanh %18 : vector<8x128xf32>
    %c1_i32 = arith.constant 1 : i32
    %c8_i32_18 = arith.constant 8 : i32
    %24 = arith.muli %c1_i32, %c8_i32_18 : i32
    %25 = tpu.assume_multiple %24, 8 : i32
    %26 = arith.index_cast %25 : i32 to index
    %c0_19 = arith.constant 0 : index
    %27 = vector.load %arg9[%26, %c0_19] : memref<64x128xf32, #tpu.memory_space<vmem>>, vector<8x128xf32>
    %cst_20 = arith.constant dense<0.000000e+00> : vector<8x128xf32>
    %28 = tpu.matmul %23, %11, %cst_20 {dimension_numbers = #tpu.dot_dimension_numbers<[1], [0], [0], [1], [0, 0, 1, 1], [], []>} : vector<8x128xf32>, vector<128x128xf32>, vector<8x128xf32> -> vector<8x128xf32>
    %29 = arith.addf %27, %28 : vector<8x128xf32>
    %30 = arith.index_cast %c1_i32 : i32 to index
    %c0_21 = arith.constant 0 : index
    %c0_22 = arith.constant 0 : index
    %31 = vector.load %arg7[%30, %c0_21, %c0_22] : memref<8x8x128xf32, #tpu.memory_space<vmem>>, vector<1x8x128xf32>
    %32 = vector.shape_cast %31 : vector<1x8x128xf32> to vector<8x128xf32>
    %33 = vector.shape_cast %29 : vector<8x128xf32> to vector<1x8x128xf32>
    tpu.vector_store %arg7[%30, %c0_21, %c0_22], %33 {strides = array<i32>} : memref<8x8x128xf32, #tpu.memory_space<vmem>>, vector<1x8x128xf32>,
    %34 = math.tanh %29 : vector<8x128xf32>
    %c2_i32 = arith.constant 2 : i32
    %c8_i32_23 = arith.constant 8 : i32
    %35 = arith.muli %c2_i32, %c8_i32_23 : i32
    %36 = tpu.assume_multiple %35, 8 : i32
    %37 = arith.index_cast %36 : i32 to index
    %c0_24 = arith.constant 0 : index
    %38 = vector.load %arg9[%37, %c0_24] : memref<64x128xf32, #tpu.memory_space<vmem>>, vector<8x128xf32>
    %cst_25 = arith.constant dense<0.000000e+00> : vector<8x128xf32>
    %39 = tpu.matmul %34, %11, %cst_25 {dimension_numbers = #tpu.dot_dimension_numbers<[1], [0], [0], [1], [0, 0, 1, 1], [], []>} : vector<8x128xf32>, vector<128x128xf32>, vector<8x128xf32> -> vector<8x128xf32>
    %40 = arith.addf %38, %39 : vector<8x128xf32>
    %41 = arith.index_cast %c2_i32 : i32 to index
    %c0_26 = arith.constant 0 : index
    %c0_27 = arith.constant 0 : index
    %42 = vector.load %arg7[%41, %c0_26, %c0_27] : memref<8x8x128xf32, #tpu.memory_space<vmem>>, vector<1x8x128xf32>
    %43 = vector.shape_cast %42 : vector<1x8x128xf32> to vector<8x128xf32>
    %44 = vector.shape_cast %40 : vector<8x128xf32> to vector<1x8x128xf32>
    tpu.vector_store %arg7[%41, %c0_26, %c0_27], %44 {strides = array<i32>} : memref<8x8x128xf32, #tpu.memory_space<vmem>>, vector<1x8x128xf32>,
    %45 = math.tanh %40 : vector<8x128xf32>
    %c3_i32 = arith.constant 3 : i32
    %c8_i32_28 = arith.constant 8 : i32
    %46 = arith.muli %c3_i32, %c8_i32_28 : i32
    %47 = tpu.assume_multiple %46, 8 : i32
    %48 = arith.index_cast %47 : i32 to index
    %c0_29 = arith.constant 0 : index
    %49 = vector.load %arg9[%48, %c0_29] : memref<64x128xf32, #tpu.memory_space<vmem>>, vector<8x128xf32>
    %cst_30 = arith.constant dense<0.000000e+00> : vector<8x128xf32>
    %50 = tpu.matmul %45, %11, %cst_30 {dimension_numbers = #tpu.dot_dimension_numbers<[1], [0], [0], [1], [0, 0, 1, 1], [], []>} : vector<8x128xf32>, vector<128x128xf32>, vector<8x128xf32> -> vector<8x128xf32>
    %51 = arith.addf %49, %50 : vector<8x128xf32>
    %52 = arith.index_cast %c3_i32 : i32 to index
    %c0_31 = arith.constant 0 : index
    %c0_32 = arith.constant 0 : index
    %53 = vector.load %arg7[%52, %c0_31, %c0_32] : memref<8x8x128xf32, #tpu.memory_space<vmem>>, vector<1x8x128xf32>
    %54 = vector.shape_cast %53 : vector<1x8x128xf32> to vector<8x128xf32>
    %55 = vector.shape_cast %51 : vector<8x128xf32> to vector<1x8x128xf32>
    tpu.vector_store %arg7[%52, %c0_31, %c0_32], %55 {strides = array<i32>} : memref<8x8x128xf32, #tpu.memory_space<vmem>>, vector<1x8x128xf32>,
    %56 = math.tanh %51 : vector<8x128xf32>
    %c4_i32 = arith.constant 4 : i32
    %c8_i32_33 = arith.constant 8 : i32
    %57 = arith.muli %c4_i32, %c8_i32_33 : i32
    %58 = tpu.assume_multiple %57, 8 : i32
    %59 = arith.index_cast %58 : i32 to index
    %c0_34 = arith.constant 0 : index
    %60 = vector.load %arg9[%59, %c0_34] : memref<64x128xf32, #tpu.memory_space<vmem>>, vector<8x128xf32>
    %cst_35 = arith.constant dense<0.000000e+00> : vector<8x128xf32>
    %61 = tpu.matmul %56, %11, %cst_35 {dimension_numbers = #tpu.dot_dimension_numbers<[1], [0], [0], [1], [0, 0, 1, 1], [], []>} : vector<8x128xf32>, vector<128x128xf32>, vector<8x128xf32> -> vector<8x128xf32>
    %62 = arith.addf %60, %61 : vector<8x128xf32>
    %63 = arith.index_cast %c4_i32 : i32 to index
    %c0_36 = arith.constant 0 : index
    %c0_37 = arith.constant 0 : index
    %64 = vector.load %arg7[%63, %c0_36, %c0_37] : memref<8x8x128xf32, #tpu.memory_space<vmem>>, vector<1x8x128xf32>
    %65 = vector.shape_cast %64 : vector<1x8x128xf32> to vector<8x128xf32>
    %66 = vector.shape_cast %62 : vector<8x128xf32> to vector<1x8x128xf32>
    tpu.vector_store %arg7[%63, %c0_36, %c0_37], %66 {strides = array<i32>} : memref<8x8x128xf32, #tpu.memory_space<vmem>>, vector<1x8x128xf32>,
    %67 = math.tanh %62 : vector<8x128xf32>
    %c5_i32 = arith.constant 5 : i32
    %c8_i32_38 = arith.constant 8 : i32
    %68 = arith.muli %c5_i32, %c8_i32_38 : i32
    %69 = tpu.assume_multiple %68, 8 : i32
    %70 = arith.index_cast %69 : i32 to index
    %c0_39 = arith.constant 0 : index
    %71 = vector.load %arg9[%70, %c0_39] : memref<64x128xf32, #tpu.memory_space<vmem>>, vector<8x128xf32>
    %cst_40 = arith.constant dense<0.000000e+00> : vector<8x128xf32>
    %72 = tpu.matmul %67, %11, %cst_40 {dimension_numbers = #tpu.dot_dimension_numbers<[1], [0], [0], [1], [0, 0, 1, 1], [], []>} : vector<8x128xf32>, vector<128x128xf32>, vector<8x128xf32> -> vector<8x128xf32>
    %73 = arith.addf %71, %72 : vector<8x128xf32>
    %74 = arith.index_cast %c5_i32 : i32 to index
    %c0_41 = arith.constant 0 : index
    %c0_42 = arith.constant 0 : index
    %75 = vector.load %arg7[%74, %c0_41, %c0_42] : memref<8x8x128xf32, #tpu.memory_space<vmem>>, vector<1x8x128xf32>
    %76 = vector.shape_cast %75 : vector<1x8x128xf32> to vector<8x128xf32>
    %77 = vector.shape_cast %73 : vector<8x128xf32> to vector<1x8x128xf32>
    tpu.vector_store %arg7[%74, %c0_41, %c0_42], %77 {strides = array<i32>} : memref<8x8x128xf32, #tpu.memory_space<vmem>>, vector<1x8x128xf32>,
    %78 = math.tanh %73 : vector<8x128xf32>
    %c6_i32 = arith.constant 6 : i32
    %c8_i32_43 = arith.constant 8 : i32
    %79 = arith.muli %c6_i32, %c8_i32_43 : i32
    %80 = tpu.assume_multiple %79, 8 : i32
    %81 = arith.index_cast %80 : i32 to index
    %c0_44 = arith.constant 0 : index
    %82 = vector.load %arg9[%81, %c0_44] : memref<64x128xf32, #tpu.memory_space<vmem>>, vector<8x128xf32>
    %cst_45 = arith.constant dense<0.000000e+00> : vector<8x128xf32>
    %83 = tpu.matmul %78, %11, %cst_45 {dimension_numbers = #tpu.dot_dimension_numbers<[1], [0], [0], [1], [0, 0, 1, 1], [], []>} : vector<8x128xf32>, vector<128x128xf32>, vector<8x128xf32> -> vector<8x128xf32>
    %84 = arith.addf %82, %83 : vector<8x128xf32>
    %85 = arith.index_cast %c6_i32 : i32 to index
    %c0_46 = arith.constant 0 : index
    %c0_47 = arith.constant 0 : index
    %86 = vector.load %arg7[%85, %c0_46, %c0_47] : memref<8x8x128xf32, #tpu.memory_space<vmem>>, vector<1x8x128xf32>
    %87 = vector.shape_cast %86 : vector<1x8x128xf32> to vector<8x128xf32>
    %88 = vector.shape_cast %84 : vector<8x128xf32> to vector<1x8x128xf32>
    tpu.vector_store %arg7[%85, %c0_46, %c0_47], %88 {strides = array<i32>} : memref<8x8x128xf32, #tpu.memory_space<vmem>>, vector<1x8x128xf32>,
    %89 = math.tanh %84 : vector<8x128xf32>
    %c7_i32 = arith.constant 7 : i32
    %c8_i32_48 = arith.constant 8 : i32
    %90 = arith.muli %c7_i32, %c8_i32_48 : i32
    %91 = tpu.assume_multiple %90, 8 : i32
    %92 = arith.index_cast %91 : i32 to index
    %c0_49 = arith.constant 0 : index
    %93 = vector.load %arg9[%92, %c0_49] : memref<64x128xf32, #tpu.memory_space<vmem>>, vector<8x128xf32>
    %cst_50 = arith.constant dense<0.000000e+00> : vector<8x128xf32>
    %94 = tpu.matmul %89, %11, %cst_50 {dimension_numbers = #tpu.dot_dimension_numbers<[1], [0], [0], [1], [0, 0, 1, 1], [], []>} : vector<8x128xf32>, vector<128x128xf32>, vector<8x128xf32> -> vector<8x128xf32>
    %95 = arith.addf %93, %94 : vector<8x128xf32>
    %96 = arith.index_cast %c7_i32 : i32 to index
    %c0_51 = arith.constant 0 : index
    %c0_52 = arith.constant 0 : index
    %97 = vector.load %arg7[%96, %c0_51, %c0_52] : memref<8x8x128xf32, #tpu.memory_space<vmem>>, vector<1x8x128xf32>
    %98 = vector.shape_cast %97 : vector<1x8x128xf32> to vector<8x128xf32>
    %99 = vector.shape_cast %95 : vector<8x128xf32> to vector<1x8x128xf32>
    tpu.vector_store %arg7[%96, %c0_51, %c0_52], %99 {strides = array<i32>} : memref<8x8x128xf32, #tpu.memory_space<vmem>>, vector<1x8x128xf32>,
    %100 = math.tanh %95 : vector<8x128xf32>
    %c8_i32_53 = arith.constant 8 : i32
    %c0_54 = arith.constant 0 : index
    %c0_55 = arith.constant 0 : index
    %101 = vector.load %arg8[%c0_54, %c0_55] : memref<8x128xf32, #tpu.memory_space<vmem>>, vector<8x128xf32>
    tpu.vector_store %arg8[%c0_54, %c0_55], %100 {strides = array<i32>} : memref<8x128xf32, #tpu.memory_space<vmem>>, vector<8x128xf32>,
    %c0_56 = arith.constant 0 : index
    %c0_57 = arith.constant 0 : index
    %c0_58 = arith.constant 0 : index
    %102 = vector.load %arg7[%c0_56, %c0_57, %c0_58] : memref<8x8x128xf32, #tpu.memory_space<vmem>>, vector<8x8x128xf32>
    %103 = tpu.iota {dimensions = array<i32: 2>} : vector<8x8x128xi32>
    %c32_i32 = arith.constant 32 : i32
    %104 = vector.broadcast %c32_i32 : i32 to vector<8x8x128xi32>
    %105 = arith.cmpi sge, %103, %104 : vector<8x8x128xi32>
    %c40_i32 = arith.constant 40 : i32
    %106 = vector.broadcast %c40_i32 : i32 to vector<8x8x128xi32>
    %107 = arith.cmpi slt, %103, %106 : vector<8x8x128xi32>
    %108 = arith.andi %105, %107 : vector<8x8x128xi1>
    %cst_59 = arith.constant 0xFF800000 : f32
    %109 = vector.broadcast %cst_59 : f32 to vector<8x8x128xf32>
    %110 = arith.select %108, %102, %109 : vector<8x8x128xi1>, vector<8x8x128xf32>
    %cst_60 = arith.constant dense<0xFF800000> : vector<8x8xf32>
    %111 = vector.multi_reduction <maximumf>, %110, %cst_60 [2] : vector<8x8x128xf32> to vector<8x8xf32>
    %112 = vector.shape_cast %111 : vector<8x8xf32> to vector<8x8x1xf32>
    %113 = vector.broadcast %112 : vector<8x8x1xf32> to vector<8x8x128xf32>
    %114 = arith.subf %110, %113 : vector<8x8x128xf32>
    %115 = math.exp %114 : vector<8x8x128xf32>
    %cst_61 = arith.constant dense<0.000000e+00> : vector<8x8xf32>
    %116 = vector.multi_reduction <add>, %115, %cst_61 [2] : vector<8x8x128xf32> to vector<8x8xf32>
    %117 = vector.shape_cast %116 : vector<8x8xf32> to vector<8x8x1xf32>
    %118 = vector.broadcast %112 : vector<8x8x1xf32> to vector<8x8x128xf32>
    %119 = arith.subf %102, %118 : vector<8x8x128xf32>
    %120 = math.log %117 : vector<8x8x1xf32>
    %121 = vector.broadcast %120 : vector<8x8x1xf32> to vector<8x8x128xf32>
    %122 = arith.subf %119, %121 : vector<8x8x128xf32>
    %c0_62 = arith.constant 0 : index
    %c0_63 = arith.constant 0 : index
    %c0_64 = arith.constant 0 : index
    %123 = vector.load %arg7[%c0_62, %c0_63, %c0_64] : memref<8x8x128xf32, #tpu.memory_space<vmem>>, vector<8x8x128xf32>
    tpu.vector_store %arg7[%c0_62, %c0_63, %c0_64], %122 {strides = array<i32>} : memref<8x8x128xf32, #tpu.memory_space<vmem>>, vector<8x8x128xf32>,
    return
  }
  func.func @transform_0(%arg0: i32, %arg1: i32) -> (i32, i32, i32) {
    %c0_i32 = arith.constant 0 : i32
    %c0_i32_0 = arith.constant 0 : i32
    return %arg0, %arg1, %c0_i32 : i32, i32, i32
  }
  func.func @transform_1(%arg0: i32, %arg1: i32) -> (i32, i32) {
    %c0_i32 = arith.constant 0 : i32
    %c0_i32_0 = arith.constant 0 : i32
    return %arg0, %c0_i32 : i32, i32
  }
  func.func @transform_2(%arg0: i32, %arg1: i32) -> (i32, i32) {
    %c0_i32 = arith.constant 0 : i32
    %c0_i32_0 = arith.constant 0 : i32
    %c0_i32_1 = arith.constant 0 : i32
    return %c0_i32, %c0_i32_0 : i32, i32
  }
  func.func @transform_3(%arg0: i32, %arg1: i32) -> (i32, i32) {
    %c0_i32 = arith.constant 0 : i32
    %c0_i32_0 = arith.constant 0 : i32
    %c0_i32_1 = arith.constant 0 : i32
    return %c0_i32, %c0_i32_0 : i32, i32
  }
  func.func @transform_4(%arg0: i32, %arg1: i32) -> (i32, i32) {
    %c0_i32 = arith.constant 0 : i32
    %c0_i32_0 = arith.constant 0 : i32
    %c0_i32_1 = arith.constant 0 : i32
    return %c0_i32, %c0_i32_0 : i32, i32
  }
  func.func @transform_5(%arg0: i32, %arg1: i32) -> (i32, i32, i32) {
    %c0_i32 = arith.constant 0 : i32
    %c0_i32_0 = arith.constant 0 : i32
    return %arg1, %arg0, %c0_i32 : i32, i32, i32
  }
  func.func @transform_6(%arg0: i32, %arg1: i32) -> (i32, i32) {
    %c0_i32 = arith.constant 0 : i32
    %c0_i32_0 = arith.constant 0 : i32
    return %arg0, %c0_i32 : i32, i32
  }
}

</mosaic_0001>

<llo_original>
// kernel: rnn_sequence_forward.1
$region0: #{rnn_sequence_forward.1}
  #allocation0 [shape = 'u32[]', space=smem, size = 0x4, offset = 0x4, fixed_abs, tag = 'smem constant byte address 0x4 - core index']
  #allocation1 [shape = 'u32[144,128]{1,0:T(1,128)}', space=vmem, size = 0x12000, scoped, tag = 'internal scratch']
  #allocation2 [shape = 'f32[64,128]{1,0:T(8,128)}', space=vmem, size = 0x8000, scoped, tag = 'scratch operand']
  %s0 = inlined_call_operand.vmem [shape: f32[1,64,16], index: 0, kind: input, shape index: {}]
  %s1 = inlined_call_operand.vmem [shape: f32[8,128], index: 1, kind: input, shape index: {}]
  %s2 = inlined_call_operand.vmem [shape: f32[16,128], index: 2, kind: input, shape index: {}]
  %s3 = inlined_call_operand.vmem [shape: f32[1,128], index: 3, kind: input, shape index: {}]
  %s4 = inlined_call_operand.vmem [shape: f32[128,128], index: 4, kind: input, shape index: {}]
  %s5 = inlined_call_operand.vmem [shape: f32[8,8,128], index: 5, kind: output, shape index: {0}]
  %s6 = inlined_call_operand.vmem [shape: f32[8,128], index: 6, kind: output, shape index: {1}]
  %7 = xla_tuple %s5, %s6
  %s8 = sld [smem:[#allocation0]]
  $region42: #{rnn_sequence_forward.1} parent=0
    _
  %s10 = ssub.s32 1, %s8
  %s11 = scalar_select 0, %s10, %s8
  // Predicated region
  $region2: #{rnn_sequence_forward.1} parent=0 // pred_check
    _
  $region3: #{rnn_sequence_forward.1} parent=0 // pred_check_branch
    %13 = sbr.rel (0) target = $region5
  $region4: #{rnn_sequence_forward.1} parent=0 // pred_region
    _
  $region5: #{rnn_sequence_forward.1} parent=0 // pred_fallthru
    _
  // Predicated region
  $region6: #{rnn_sequence_forward.1} parent=0 // pred_check
    _
  $region7: #{rnn_sequence_forward.1} parent=0 // pred_check_branch
    %15 = sbr.rel (0) target = $region9
  $region8: #{rnn_sequence_forward.1} parent=0 // pred_region
    _
  $region9: #{rnn_sequence_forward.1} parent=0 // pred_fallthru
    _
  // Predicated region
  $region10: #{rnn_sequence_forward.1} parent=0 // pred_check
    _
  $region11: #{rnn_sequence_forward.1} parent=0 // pred_check_branch
    %17 = sbr.rel (0) target = $region13
  $region12: #{rnn_sequence_forward.1} parent=0 // pred_region
    _
  $region13: #{rnn_sequence_forward.1} parent=0 // pred_fallthru
    _
  // Predicated region
  $region14: #{rnn_sequence_forward.1} parent=0 // pred_check
    _
  $region15: #{rnn_sequence_forward.1} parent=0 // pred_check_branch
    %19 = sbr.rel (0) target = $region17
  $region16: #{rnn_sequence_forward.1} parent=0 // pred_region
    _
  $region17: #{rnn_sequence_forward.1} parent=0 // pred_fallthru
    _
  // Predicated region
  $region18: #{rnn_sequence_forward.1} parent=0 // pred_check
    _
  $region19: #{rnn_sequence_forward.1} parent=0 // pred_check_branch
    %21 = sbr.rel (0) target = $region21
  $region20: #{rnn_sequence_forward.1} parent=0 // pred_region
    _
  $region21: #{rnn_sequence_forward.1} parent=0 // pred_fallthru
    _
  %p22 = scmp.eq.s32.totalorder 0, 0
  // Predicated region
  $region22: #{rnn_sequence_forward.1} parent=0 // pred_check
    %p23 = pneg %p22
  $region23: #{rnn_sequence_forward.1} parent=0 // pred_check_branch
    %25 = sbr.rel (%p23) target = $region25
  $region24: #{rnn_sequence_forward.1} parent=0 // pred_region
    %v26 = vld [vmem:[%s1] sm:$0xff]
    %27 = vst [vmem:[%s6] sm:$0xff] %v26
  $region25: #{rnn_sequence_forward.1} parent=0 // pred_fallthru
    _
  %v28 = vld [vmem:[%s0] sm:$0xff]
  %v29 = vld [vmem:[%s0 + $0x8] sm:$0xff]
  %v30 = vld [vmem:[%s0 + $0x10] sm:$0xff]
  %v31 = vld [vmem:[%s0 + $0x18] sm:$0xff]
  %v32 = vld [vmem:[%s0 + $0x20] sm:$0xff]
  %v33 = vld [vmem:[%s0 + $0x28] sm:$0xff]
  %v34 = vld [vmem:[%s0 + $0x30] sm:$0xff]
  %v35 = vld [vmem:[%s0 + $0x38] sm:$0xff]
  %v36 = vld [vmem:[%s2] sm:$0xff]
  %v37 = vld [vmem:[%s2 + $0x8] sm:$0xff]
  %v38 = vld [vmem:[%s3] sm:$0x1]
  %v40 = vlaneseq
  %v41 = vshrl.u32 %v40, 7
  %v42 = vsub.s32 0, %v41
  %v43 = vrot.slane %v38, %v42
  %vm45 = vcmask 130048
  %v47 = vsel %vm45, %v28, 0
  %v50 = vsel %vm45, %v29, 0
  %v53 = vsel %vm45, %v30, 0
  %v56 = vsel %vm45, %v31, 0
  %v59 = vsel %vm45, %v32, 0
  %v62 = vsel %vm45, %v33, 0
  %v65 = vsel %vm45, %v34, 0
  %v68 = vsel %vm45, %v35, 0
  %70 = vmatprep.subr.mxu0 0.0
  %71 = vmatpush1.msra.mxu0 0.0
  %72 = vmatprep.subr.mxu0 0.0
  %73 = vmatpush1.msra.mxu0 0.0
  %74 = vmatprep.subr.mxu0 0.0
  %75 = vmatpush1.msra.mxu0 0.0
  %76 = vmatprep.subr.mxu0 0.0
  %77 = vmatpush1.msra.mxu0 0.0
  %78 = vmatprep.subr.mxu0 0.0
  %79 = vmatpush1.msra.mxu0 0.0
  %80 = vmatprep.subr.mxu0 0.0
  %81 = vmatpush1.msra.mxu0 0.0
  %82 = vmatprep.subr.mxu0 0.0
  %83 = vmatpush1.msra.mxu0 0.0
  %84 = vmatprep.subr.mxu0 0.0
  %85 = vmatpush1.msra.mxu0 0.0
  %86 = vmatprep.subr.mxu0 0.0
  %87 = vmatpush1.msra.mxu0 0.0
  %88 = vmatprep.subr.mxu0 0.0
  %89 = vmatpush1.msra.mxu0 0.0
  %90 = vmatprep.subr.mxu0 0.0
  %91 = vmatpush1.msra.mxu0 0.0
  %92 = vmatprep.subr.mxu0 0.0
  %93 = vmatpush1.msra.mxu0 0.0
  %94 = vmatprep.subr.mxu0 0.0
  %95 = vmatpush1.msra.mxu0 0.0
  %96 = vmatprep.subr.mxu0 0.0
  %97 = vmatpush1.msra.mxu0 0.0
  %98 = vmatprep.subr.mxu0 0.0
  %99 = vmatpush1.msra.mxu0 %v37
  %100 = vmatprep.subr.mxu0 0.0
  %101 = vmatpush1.msra.mxu0 %v36
  %102 = vmatprep.subr.mxu0 0.0
  %103 = vmatpush2.msra.mxu0 0.0
  %104 = vmatprep.subr.mxu0 0.0
  %105 = vmatpush2.msra.mxu0 0.0
  %106 = vmatprep.subr.mxu0 0.0
  %107 = vmatpush2.msra.mxu0 0.0
  %108 = vmatprep.subr.mxu0 0.0
  %109 = vmatpush2.msra.mxu0 0.0
  %110 = vmatprep.subr.mxu0 0.0
  %111 = vmatpush2.msra.mxu0 0.0
  %112 = vmatprep.subr.mxu0 0.0
  %113 = vmatpush2.msra.mxu0 0.0
  %114 = vmatprep.subr.mxu0 0.0
  %115 = vmatpush2.msra.mxu0 0.0
  %116 = vmatprep.subr.mxu0 0.0
  %117 = vmatpush2.msra.mxu0 0.0
  %118 = vmatprep.subr.mxu0 0.0
  %119 = vmatpush2.msra.mxu0 0.0
  %120 = vmatprep.subr.mxu0 0.0
  %121 = vmatpush2.msra.mxu0 0.0
  %122 = vmatprep.subr.mxu0 0.0
  %123 = vmatpush2.msra.mxu0 0.0
  %124 = vmatprep.subr.mxu0 0.0
  %125 = vmatpush2.msra.mxu0 0.0
  %126 = vmatprep.subr.mxu0 0.0
  %127 = vmatpush2.msra.mxu0 0.0
  %128 = vmatprep.subr.mxu0 0.0
  %129 = vmatpush2.msra.mxu0 0.0
  %130 = vmatprep.subr.mxu0 0.0
  %131 = vmatpush2.msra.mxu0 0.0
  %132 = vmatprep.subr.mxu0 0.0
  %133 = vmatpush2.msra.mxu0 0.0
  %134 = vmatprep.mubr.f32.mxu0 0.0
  %135 = vmatmul.mubr.f32.gmra.mxu0 %v47
  %v136 = vpop.f32.mrf.mxu0
  %v137 = vadd.f32 %v43, %v136
  %v138 = vpop.f32.mrf.mxu0
  %139 = vmatprep.mubr.f32.mxu0 0.0
  %140 = vmatmul.mubr.f32.gmra.mxu0 %v50
  %v141 = vpop.f32.mrf.mxu0
  %v142 = vadd.f32 %v43, %v141
  %v143 = vpop.f32.mrf.mxu0
  %144 = vmatprep.mubr.f32.mxu0 0.0
  %145 = vmatmul.mubr.f32.gmra.mxu0 %v53
  %v146 = vpop.f32.mrf.mxu0
  %v147 = vadd.f32 %v43, %v146
  %v148 = vpop.f32.mrf.mxu0
  %149 = vmatprep.mubr.f32.mxu0 0.0
  %150 = vmatmul.mubr.f32.gmra.mxu0 %v56
  %v151 = vpop.f32.mrf.mxu0
  %v152 = vadd.f32 %v43, %v151
  %v153 = vpop.f32.mrf.mxu0
  %154 = vmatprep.mubr.f32.mxu0 0.0
  %155 = vmatmul.mubr.f32.gmra.mxu0 %v59
  %v156 = vpop.f32.mrf.mxu0
  %v157 = vadd.f32 %v43, %v156
  %v158 = vpop.f32.mrf.mxu0
  %159 = vmatprep.mubr.f32.mxu0 0.0
  %160 = vmatmul.mubr.f32.gmra.mxu0 %v62
  %v161 = vpop.f32.mrf.mxu0
  %v162 = vadd.f32 %v43, %v161
  %v163 = vpop.f32.mrf.mxu0
  %164 = vmatprep.mubr.f32.mxu0 0.0
  %165 = vmatmul.mubr.f32.gmra.mxu0 %v65
  %v166 = vpop.f32.mrf.mxu0
  %v167 = vadd.f32 %v43, %v166
  %v168 = vpop.f32.mrf.mxu0
  %169 = vmatprep.mubr.f32.mxu0 0.0
  %170 = vmatmul.mubr.f32.gmra.mxu0 %v68
  %v171 = vpop.f32.mrf.mxu0
  %v172 = vadd.f32 %v43, %v171
  %v173 = vpop.f32.mrf.mxu0
  %174 = vdwg.mxu0
  %175 = vst [vmem:[#allocation2] sm:$0xff] %v137
  %176 = vst [vmem:[#allocation2 + $0x8] sm:$0xff] %v142
  %177 = vst [vmem:[#allocation2 + $0x10] sm:$0xff] %v147
  %178 = vst [vmem:[#allocation2 + $0x18] sm:$0xff] %v152
  %179 = vst [vmem:[#allocation2 + $0x20] sm:$0xff] %v157
  %180 = vst [vmem:[#allocation2 + $0x28] sm:$0xff] %v162
  %181 = vst [vmem:[#allocation2 + $0x30] sm:$0xff] %v167
  %182 = vst [vmem:[#allocation2 + $0x38] sm:$0xff] %v172
  %v183 = vld [vmem:[%s4] sm:$0xff]
  %v184 = vld [vmem:[%s4 + $0x8] sm:$0xff]
  %v185 = vld [vmem:[%s4 + $0x10] sm:$0xff]
  %v186 = vld [vmem:[%s4 + $0x18] sm:$0xff]
  %v187 = vld [vmem:[%s4 + $0x20] sm:$0xff]
  %v188 = vld [vmem:[%s4 + $0x28] sm:$0xff]
  %v189 = vld [vmem:[%s4 + $0x30] sm:$0xff]
  %v190 = vld [vmem:[%s4 + $0x38] sm:$0xff]
  %v191 = vld [vmem:[%s4 + $0x40] sm:$0xff]
  %v192 = vld [vmem:[%s4 + $0x48] sm:$0xff]
  %v193 = vld [vmem:[%s4 + $0x50] sm:$0xff]
  %v194 = vld [vmem:[%s4 + $0x58] sm:$0xff]
  %v195 = vld [vmem:[%s4 + $0x60] sm:$0xff]
  %v196 = vld [vmem:[%s4 + $0x68] sm:$0xff]
  %v197 = vld [vmem:[%s4 + $0x70] sm:$0xff]
  %v198 = vld [vmem:[%s4 + $0x78] sm:$0xff]
  %v199 = vld [vmem:[%s6] sm:$0xff]
  %v200 = vld [vmem:[#allocation2] sm:$0xff]
  %201 = vmatprep.subr.mxu0 0.0
  %202 = vmatpush1.msra.mxu0 %v198
  %203 = vmatprep.subr.mxu0 0.0
  %204 = vmatpush1.msra.mxu0 %v197
  %205 = vmatprep.subr.mxu0 0.0
  %206 = vmatpush1.msra.mxu0 %v196
  %207 = vmatprep.subr.mxu0 0.0
  %208 = vmatpush1.msra.mxu0 %v195
  %209 = vmatprep.subr.mxu0 0.0
  %210 = vmatpush1.msra.mxu0 %v194
  %211 = vmatprep.subr.mxu0 0.0
  %212 = vmatpush1.msra.mxu0 %v193
  %213 = vmatprep.subr.mxu0 0.0
  %214 = vmatpush1.msra.mxu0 %v192
  %215 = vmatprep.subr.mxu0 0.0
  %216 = vmatpush1.msra.mxu0 %v191
  %217 = vmatprep.subr.mxu0 0.0
  %218 = vmatpush1.msra.mxu0 %v190
  %219 = vmatprep.subr.mxu0 0.0
  %220 = vmatpush1.msra.mxu0 %v189
  %221 = vmatprep.subr.mxu0 0.0
  %222 = vmatpush1.msra.mxu0 %v188
  %223 = vmatprep.subr.mxu0 0.0
  %224 = vmatpush1.msra.mxu0 %v187
  %225 = vmatprep.subr.mxu0 0.0
  %226 = vmatpush1.msra.mxu0 %v186
  %227 = vmatprep.subr.mxu0 0.0
  %228 = vmatpush1.msra.mxu0 %v185
  %229 = vmatprep.subr.mxu0 0.0
  %230 = vmatpush1.msra.mxu0 %v184
  %231 = vmatprep.subr.mxu0 0.0
  %232 = vmatpush1.msra.mxu0 %v183
  %233 = vmatprep.subr.mxu0 0.0
  %234 = vmatpush2.msra.mxu0 0.0
  %235 = vmatprep.subr.mxu0 0.0
  %236 = vmatpush2.msra.mxu0 0.0
  %237 = vmatprep.subr.mxu0 0.0
  %238 = vmatpush2.msra.mxu0 0.0
  %239 = vmatprep.subr.mxu0 0.0
  %240 = vmatpush2.msra.mxu0 0.0
  %241 = vmatprep.subr.mxu0 0.0
  %242 = vmatpush2.msra.mxu0 0.0
  %243 = vmatprep.subr.mxu0 0.0
  %244 = vmatpush2.msra.mxu0 0.0
  %245 = vmatprep.subr.mxu0 0.0
  %246 = vmatpush2.msra.mxu0 0.0
  %247 = vmatprep.subr.mxu0 0.0
  %248 = vmatpush2.msra.mxu0 0.0
  %249 = vmatprep.subr.mxu0 0.0
  %250 = vmatpush2.msra.mxu0 0.0
  %251 = vmatprep.subr.mxu0 0.0
  %252 = vmatpush2.msra.mxu0 0.0
  %253 = vmatprep.subr.mxu0 0.0
  %254 = vmatpush2.msra.mxu0 0.0
  %255 = vmatprep.subr.mxu0 0.0
  %256 = vmatpush2.msra.mxu0 0.0
  %257 = vmatprep.subr.mxu0 0.0
  %258 = vmatpush2.msra.mxu0 0.0
  %259 = vmatprep.subr.mxu0 0.0
  %260 = vmatpush2.msra.mxu0 0.0
  %261 = vmatprep.subr.mxu0 0.0
  %262 = vmatpush2.msra.mxu0 0.0
  %263 = vmatprep.subr.mxu0 0.0
  %264 = vmatpush2.msra.mxu0 0.0
  %265 = vmatprep.mubr.f32.mxu0 0.0
  %266 = vmatmul.mubr.f32.gmra.mxu0 %v199
  %v267 = vpop.f32.mrf.mxu0
  %v268 = vadd.f32 0.0, %v267
  %v269 = vpop.f32.mrf.mxu0
  %270 = vdwg.mxu0
  %v271 = vadd.f32 %v200, %v268
  %272 = vst [vmem:[%s5] sm:$0xff] %v271
  %v273 = vtanh.pop %v271
  %s274 = scalar_lea.vmem [#allocation2], 8
  %v275 = vld [vmem:[%s274] sm:$0xff]
  %276 = vmatprep.subr.mxu0 0.0
  %277 = vmatpush1.msra.mxu0 %v198
  %278 = vmatprep.subr.mxu0 0.0
  %279 = vmatpush1.msra.mxu0 %v197
  %280 = vmatprep.subr.mxu0 0.0
  %281 = vmatpush1.msra.mxu0 %v196
  %282 = vmatprep.subr.mxu0 0.0
  %283 = vmatpush1.msra.mxu0 %v195
  %284 = vmatprep.subr.mxu0 0.0
  %285 = vmatpush1.msra.mxu0 %v194
  %286 = vmatprep.subr.mxu0 0.0
  %287 = vmatpush1.msra.mxu0 %v193
  %288 = vmatprep.subr.mxu0 0.0
  %289 = vmatpush1.msra.mxu0 %v192
  %290 = vmatprep.subr.mxu0 0.0
  %291 = vmatpush1.msra.mxu0 %v191
  %292 = vmatprep.subr.mxu0 0.0
  %293 = vmatpush1.msra.mxu0 %v190
  %294 = vmatprep.subr.mxu0 0.0
  %295 = vmatpush1.msra.mxu0 %v189
  %296 = vmatprep.subr.mxu0 0.0
  %297 = vmatpush1.msra.mxu0 %v188
  %298 = vmatprep.subr.mxu0 0.0
  %299 = vmatpush1.msra.mxu0 %v187
  %300 = vmatprep.subr.mxu0 0.0
  %301 = vmatpush1.msra.mxu0 %v186
  %302 = vmatprep.subr.mxu0 0.0
  %303 = vmatpush1.msra.mxu0 %v185
  %304 = vmatprep.subr.mxu0 0.0
  %305 = vmatpush1.msra.mxu0 %v184
  %306 = vmatprep.subr.mxu0 0.0
  %307 = vmatpush1.msra.mxu0 %v183
  %308 = vmatprep.subr.mxu0 0.0
  %309 = vmatpush2.msra.mxu0 0.0
  %310 = vmatprep.subr.mxu0 0.0
  %311 = vmatpush2.msra.mxu0 0.0
  %312 = vmatprep.subr.mxu0 0.0
  %313 = vmatpush2.msra.mxu0 0.0
  %314 = vmatprep.subr.mxu0 0.0
  %315 = vmatpush2.msra.mxu0 0.0
  %316 = vmatprep.subr.mxu0 0.0
  %317 = vmatpush2.msra.mxu0 0.0
  %318 = vmatprep.subr.mxu0 0.0
  %319 = vmatpush2.msra.mxu0 0.0
  %320 = vmatprep.subr.mxu0 0.0
  %321 = vmatpush2.msra.mxu0 0.0
  %322 = vmatprep.subr.mxu0 0.0
  %323 = vmatpush2.msra.mxu0 0.0
  %324 = vmatprep.subr.mxu0 0.0
  %325 = vmatpush2.msra.mxu0 0.0
  %326 = vmatprep.subr.mxu0 0.0
  %327 = vmatpush2.msra.mxu0 0.0
  %328 = vmatprep.subr.mxu0 0.0
  %329 = vmatpush2.msra.mxu0 0.0
  %330 = vmatprep.subr.mxu0 0.0
  %331 = vmatpush2.msra.mxu0 0.0
  %332 = vmatprep.subr.mxu0 0.0
  %333 = vmatpush2.msra.mxu0 0.0
  %334 = vmatprep.subr.mxu0 0.0
  %335 = vmatpush2.msra.mxu0 0.0
  %336 = vmatprep.subr.mxu0 0.0
  %337 = vmatpush2.msra.mxu0 0.0
  %338 = vmatprep.subr.mxu0 0.0
  %339 = vmatpush2.msra.mxu0 0.0
  %340 = vmatprep.mubr.f32.mxu0 0.0
  %341 = vmatmul.mubr.f32.gmra.mxu0 %v273
  %v342 = vpop.f32.mrf.mxu0
  %v343 = vadd.f32 0.0, %v342
  %v344 = vpop.f32.mrf.mxu0
  %345 = vdwg.mxu0
  %v346 = vadd.f32 %v275, %v343
  %s347 = scalar_lea.vmem %s5, 8
  %348 = vst [vmem:[%s347] sm:$0xff] %v346
  %v349 = vtanh.pop %v346
  %s350 = scalar_lea.vmem [#allocation2], 16
  %v351 = vld [vmem:[%s350] sm:$0xff]
  %352 = vmatprep.subr.mxu0 0.0
  %353 = vmatpush1.msra.mxu0 %v198
  %354 = vmatprep.subr.mxu0 0.0
  %355 = vmatpush1.msra.mxu0 %v197
  %356 = vmatprep.subr.mxu0 0.0
  %357 = vmatpush1.msra.mxu0 %v196
  %358 = vmatprep.subr.mxu0 0.0
  %359 = vmatpush1.msra.mxu0 %v195
  %360 = vmatprep.subr.mxu0 0.0
  %361 = vmatpush1.msra.mxu0 %v194
  %362 = vmatprep.subr.mxu0 0.0
  %363 = vmatpush1.msra.mxu0 %v193
  %364 = vmatprep.subr.mxu0 0.0
  %365 = vmatpush1.msra.mxu0 %v192
  %366 = vmatprep.subr.mxu0 0.0
  %367 = vmatpush1.msra.mxu0 %v191
  %368 = vmatprep.subr.mxu0 0.0
  %369 = vmatpush1.msra.mxu0 %v190
  %370 = vmatprep.subr.mxu0 0.0
  %371 = vmatpush1.msra.mxu0 %v189
  %372 = vmatprep.subr.mxu0 0.0
  %373 = vmatpush1.msra.mxu0 %v188
  %374 = vmatprep.subr.mxu0 0.0
  %375 = vmatpush1.msra.mxu0 %v187
  %376 = vmatprep.subr.mxu0 0.0
  %377 = vmatpush1.msra.mxu0 %v186
  %378 = vmatprep.subr.mxu0 0.0
  %379 = vmatpush1.msra.mxu0 %v185
  %380 = vmatprep.subr.mxu0 0.0
  %381 = vmatpush1.msra.mxu0 %v184
  %382 = vmatprep.subr.mxu0 0.0
  %383 = vmatpush1.msra.mxu0 %v183
  %384 = vmatprep.subr.mxu0 0.0
  %385 = vmatpush2.msra.mxu0 0.0
  %386 = vmatprep.subr.mxu0 0.0
  %387 = vmatpush2.msra.mxu0 0.0
  %388 = vmatprep.subr.mxu0 0.0
  %389 = vmatpush2.msra.mxu0 0.0
  %390 = vmatprep.subr.mxu0 0.0
  %391 = vmatpush2.msra.mxu0 0.0
  %392 = vmatprep.subr.mxu0 0.0
  %393 = vmatpush2.msra.mxu0 0.0
  %394 = vmatprep.subr.mxu0 0.0
  %395 = vmatpush2.msra.mxu0 0.0
  %396 = vmatprep.subr.mxu0 0.0
  %397 = vmatpush2.msra.mxu0 0.0
  %398 = vmatprep.subr.mxu0 0.0
  %399 = vmatpush2.msra.mxu0 0.0
  %400 = vmatprep.subr.mxu0 0.0
  %401 = vmatpush2.msra.mxu0 0.0
  %402 = vmatprep.subr.mxu0 0.0
  %403 = vmatpush2.msra.mxu0 0.0
  %404 = vmatprep.subr.mxu0 0.0
  %405 = vmatpush2.msra.mxu0 0.0
  %406 = vmatprep.subr.mxu0 0.0
  %407 = vmatpush2.msra.mxu0 0.0
  %408 = vmatprep.subr.mxu0 0.0
  %409 = vmatpush2.msra.mxu0 0.0
  %410 = vmatprep.subr.mxu0 0.0
  %411 = vmatpush2.msra.mxu0 0.0
  %412 = vmatprep.subr.mxu0 0.0
  %413 = vmatpush2.msra.mxu0 0.0
  %414 = vmatprep.subr.mxu0 0.0
  %415 = vmatpush2.msra.mxu0 0.0
  %416 = vmatprep.mubr.f32.mxu0 0.0
  %417 = vmatmul.mubr.f32.gmra.mxu0 %v349
  %v418 = vpop.f32.mrf.mxu0
  %v419 = vadd.f32 0.0, %v418
  %v420 = vpop.f32.mrf.mxu0
  %421 = vdwg.mxu0
  %v422 = vadd.f32 %v351, %v419
  %s423 = scalar_lea.vmem %s5, 16
  %424 = vst [vmem:[%s423] sm:$0xff] %v422
  %v425 = vtanh.pop %v422
  %s426 = scalar_lea.vmem [#allocation2], 24
  %v427 = vld [vmem:[%s426] sm:$0xff]
  %428 = vmatprep.subr.mxu0 0.0
  %429 = vmatpush1.msra.mxu0 %v198
  %430 = vmatprep.subr.mxu0 0.0
  %431 = vmatpush1.msra.mxu0 %v197
  %432 = vmatprep.subr.mxu0 0.0
  %433 = vmatpush1.msra.mxu0 %v196
  %434 = vmatprep.subr.mxu0 0.0
  %435 = vmatpush1.msra.mxu0 %v195
  %436 = vmatprep.subr.mxu0 0.0
  %437 = vmatpush1.msra.mxu0 %v194
  %438 = vmatprep.subr.mxu0 0.0
  %439 = vmatpush1.msra.mxu0 %v193
  %440 = vmatprep.subr.mxu0 0.0
  %441 = vmatpush1.msra.mxu0 %v192
  %442 = vmatprep.subr.mxu0 0.0
  %443 = vmatpush1.msra.mxu0 %v191
  %444 = vmatprep.subr.mxu0 0.0
  %445 = vmatpush1.msra.mxu0 %v190
  %446 = vmatprep.subr.mxu0 0.0
  %447 = vmatpush1.msra.mxu0 %v189
  %448 = vmatprep.subr.mxu0 0.0
  %449 = vmatpush1.msra.mxu0 %v188
  %450 = vmatprep.subr.mxu0 0.0
  %451 = vmatpush1.msra.mxu0 %v187
  %452 = vmatprep.subr.mxu0 0.0
  %453 = vmatpush1.msra.mxu0 %v186
  %454 = vmatprep.subr.mxu0 0.0
  %455 = vmatpush1.msra.mxu0 %v185
  %456 = vmatprep.subr.mxu0 0.0
  %457 = vmatpush1.msra.mxu0 %v184
  %458 = vmatprep.subr.mxu0 0.0
  %459 = vmatpush1.msra.mxu0 %v183
  %460 = vmatprep.subr.mxu0 0.0
  %461 = vmatpush2.msra.mxu0 0.0
  %462 = vmatprep.subr.mxu0 0.0
  %463 = vmatpush2.msra.mxu0 0.0
  %464 = vmatprep.subr.mxu0 0.0
  %465 = vmatpush2.msra.mxu0 0.0
  %466 = vmatprep.subr.mxu0 0.0
  %467 = vmatpush2.msra.mxu0 0.0
  %468 = vmatprep.subr.mxu0 0.0
  %469 = vmatpush2.msra.mxu0 0.0
  %470 = vmatprep.subr.mxu0 0.0
  %471 = vmatpush2.msra.mxu0 0.0
  %472 = vmatprep.subr.mxu0 0.0
  %473 = vmatpush2.msra.mxu0 0.0
  %474 = vmatprep.subr.mxu0 0.0
  %475 = vmatpush2.msra.mxu0 0.0
  %476 = vmatprep.subr.mxu0 0.0
  %477 = vmatpush2.msra.mxu0 0.0
  %478 = vmatprep.subr.mxu0 0.0
  %479 = vmatpush2.msra.mxu0 0.0
  %480 = vmatprep.subr.mxu0 0.0
  %481 = vmatpush2.msra.mxu0 0.0
  %482 = vmatprep.subr.mxu0 0.0
  %483 = vmatpush2.msra.mxu0 0.0
  %484 = vmatprep.subr.mxu0 0.0
  %485 = vmatpush2.msra.mxu0 0.0
  %486 = vmatprep.subr.mxu0 0.0
  %487 = vmatpush2.msra.mxu0 0.0
  %488 = vmatprep.subr.mxu0 0.0
  %489 = vmatpush2.msra.mxu0 0.0
  %490 = vmatprep.subr.mxu0 0.0
  %491 = vmatpush2.msra.mxu0 0.0
  %492 = vmatprep.mubr.f32.mxu0 0.0
  %493 = vmatmul.mubr.f32.gmra.mxu0 %v425
  %v494 = vpop.f32.mrf.mxu0
  %v495 = vadd.f32 0.0, %v494
  %v496 = vpop.f32.mrf.mxu0
  %497 = vdwg.mxu0
  %v498 = vadd.f32 %v427, %v495
  %s499 = scalar_lea.vmem %s5, 24
  %500 = vst [vmem:[%s499] sm:$0xff] %v498
  %v501 = vtanh.pop %v498
  %s502 = scalar_lea.vmem [#allocation2], 32
  %v503 = vld [vmem:[%s502] sm:$0xff]
  %504 = vmatprep.subr.mxu0 0.0
  %505 = vmatpush1.msra.mxu0 %v198
  %506 = vmatprep.subr.mxu0 0.0
  %507 = vmatpush1.msra.mxu0 %v197
  %508 = vmatprep.subr.mxu0 0.0
  %509 = vmatpush1.msra.mxu0 %v196
  %510 = vmatprep.subr.mxu0 0.0
  %511 = vmatpush1.msra.mxu0 %v195
  %512 = vmatprep.subr.mxu0 0.0
  %513 = vmatpush1.msra.mxu0 %v194
  %514 = vmatprep.subr.mxu0 0.0
  %515 = vmatpush1.msra.mxu0 %v193
  %516 = vmatprep.subr.mxu0 0.0
  %517 = vmatpush1.msra.mxu0 %v192
  %518 = vmatprep.subr.mxu0 0.0
  %519 = vmatpush1.msra.mxu0 %v191
  %520 = vmatprep.subr.mxu0 0.0
  %521 = vmatpush1.msra.mxu0 %v190
  %522 = vmatprep.subr.mxu0 0.0
  %523 = vmatpush1.msra.mxu0 %v189
  %524 = vmatprep.subr.mxu0 0.0
  %525 = vmatpush1.msra.mxu0 %v188
  %526 = vmatprep.subr.mxu0 0.0
  %527 = vmatpush1.msra.mxu0 %v187
  %528 = vmatprep.subr.mxu0 0.0
  %529 = vmatpush1.msra.mxu0 %v186
  %530 = vmatprep.subr.mxu0 0.0
  %531 = vmatpush1.msra.mxu0 %v185
  %532 = vmatprep.subr.mxu0 0.0
  %533 = vmatpush1.msra.mxu0 %v184
  %534 = vmatprep.subr.mxu0 0.0
  %535 = vmatpush1.msra.mxu0 %v183
  %536 = vmatprep.subr.mxu0 0.0
  %537 = vmatpush2.msra.mxu0 0.0
  %538 = vmatprep.subr.mxu0 0.0
  %539 = vmatpush2.msra.mxu0 0.0
  %540 = vmatprep.subr.mxu0 0.0
  %541 = vmatpush2.msra.mxu0 0.0
  %542 = vmatprep.subr.mxu0 0.0
  %543 = vmatpush2.msra.mxu0 0.0
  %544 = vmatprep.subr.mxu0 0.0
  %545 = vmatpush2.msra.mxu0 0.0
  %546 = vmatprep.subr.mxu0 0.0
  %547 = vmatpush2.msra.mxu0 0.0
  %548 = vmatprep.subr.mxu0 0.0
  %549 = vmatpush2.msra.mxu0 0.0
  %550 = vmatprep.subr.mxu0 0.0
  %551 = vmatpush2.msra.mxu0 0.0
  %552 = vmatprep.subr.mxu0 0.0
  %553 = vmatpush2.msra.mxu0 0.0
  %554 = vmatprep.subr.mxu0 0.0
  %555 = vmatpush2.msra.mxu0 0.0
  %556 = vmatprep.subr.mxu0 0.0
  %557 = vmatpush2.msra.mxu0 0.0
  %558 = vmatprep.subr.mxu0 0.0
  %559 = vmatpush2.msra.mxu0 0.0
  %560 = vmatprep.subr.mxu0 0.0
  %561 = vmatpush2.msra.mxu0 0.0
  %562 = vmatprep.subr.mxu0 0.0
  %563 = vmatpush2.msra.mxu0 0.0
  %564 = vmatprep.subr.mxu0 0.0
  %565 = vmatpush2.msra.mxu0 0.0
  %566 = vmatprep.subr.mxu0 0.0
  %567 = vmatpush2.msra.mxu0 0.0
  %568 = vmatprep.mubr.f32.mxu0 0.0
  %569 = vmatmul.mubr.f32.gmra.mxu0 %v501
  %v570 = vpop.f32.mrf.mxu0
  %v571 = vadd.f32 0.0, %v570
  %v572 = vpop.f32.mrf.mxu0
  %573 = vdwg.mxu0
  %v574 = vadd.f32 %v503, %v571
  %s575 = scalar_lea.vmem %s5, 32
  %576 = vst [vmem:[%s575] sm:$0xff] %v574
  %v577 = vtanh.pop %v574
  %s578 = scalar_lea.vmem [#allocation2], 40
  %v579 = vld [vmem:[%s578] sm:$0xff]
  %580 = vmatprep.subr.mxu0 0.0
  %581 = vmatpush1.msra.mxu0 %v198
  %582 = vmatprep.subr.mxu0 0.0
  %583 = vmatpush1.msra.mxu0 %v197
  %584 = vmatprep.subr.mxu0 0.0
  %585 = vmatpush1.msra.mxu0 %v196
  %586 = vmatprep.subr.mxu0 0.0
  %587 = vmatpush1.msra.mxu0 %v195
  %588 = vmatprep.subr.mxu0 0.0
  %589 = vmatpush1.msra.mxu0 %v194
  %590 = vmatprep.subr.mxu0 0.0
  %591 = vmatpush1.msra.mxu0 %v193
  %592 = vmatprep.subr.mxu0 0.0
  %593 = vmatpush1.msra.mxu0 %v192
  %594 = vmatprep.subr.mxu0 0.0
  %595 = vmatpush1.msra.mxu0 %v191
  %596 = vmatprep.subr.mxu0 0.0
  %597 = vmatpush1.msra.mxu0 %v190
  %598 = vmatprep.subr.mxu0 0.0
  %599 = vmatpush1.msra.mxu0 %v189
  %600 = vmatprep.subr.mxu0 0.0
  %601 = vmatpush1.msra.mxu0 %v188
  %602 = vmatprep.subr.mxu0 0.0
  %603 = vmatpush1.msra.mxu0 %v187
  %604 = vmatprep.subr.mxu0 0.0
  %605 = vmatpush1.msra.mxu0 %v186
  %606 = vmatprep.subr.mxu0 0.0
  %607 = vmatpush1.msra.mxu0 %v185
  %608 = vmatprep.subr.mxu0 0.0
  %609 = vmatpush1.msra.mxu0 %v184
  %610 = vmatprep.subr.mxu0 0.0
  %611 = vmatpush1.msra.mxu0 %v183
  %612 = vmatprep.subr.mxu0 0.0
  %613 = vmatpush2.msra.mxu0 0.0
  %614 = vmatprep.subr.mxu0 0.0
  %615 = vmatpush2.msra.mxu0 0.0
  %616 = vmatprep.subr.mxu0 0.0
  %617 = vmatpush2.msra.mxu0 0.0
  %618 = vmatprep.subr.mxu0 0.0
  %619 = vmatpush2.msra.mxu0 0.0
  %620 = vmatprep.subr.mxu0 0.0
  %621 = vmatpush2.msra.mxu0 0.0
  %622 = vmatprep.subr.mxu0 0.0
  %623 = vmatpush2.msra.mxu0 0.0
  %624 = vmatprep.subr.mxu0 0.0
  %625 = vmatpush2.msra.mxu0 0.0
  %626 = vmatprep.subr.mxu0 0.0
  %627 = vmatpush2.msra.mxu0 0.0
  %628 = vmatprep.subr.mxu0 0.0
  %629 = vmatpush2.msra.mxu0 0.0
  %630 = vmatprep.subr.mxu0 0.0
  %631 = vmatpush2.msra.mxu0 0.0
  %632 = vmatprep.subr.mxu0 0.0
  %633 = vmatpush2.msra.mxu0 0.0
  %634 = vmatprep.subr.mxu0 0.0
  %635 = vmatpush2.msra.mxu0 0.0
  %636 = vmatprep.subr.mxu0 0.0
  %637 = vmatpush2.msra.mxu0 0.0
  %638 = vmatprep.subr.mxu0 0.0
  %639 = vmatpush2.msra.mxu0 0.0
  %640 = vmatprep.subr.mxu0 0.0
  %641 = vmatpush2.msra.mxu0 0.0
  %642 = vmatprep.subr.mxu0 0.0
  %643 = vmatpush2.msra.mxu0 0.0
  %644 = vmatprep.mubr.f32.mxu0 0.0
  %645 = vmatmul.mubr.f32.gmra.mxu0 %v577
  %v646 = vpop.f32.mrf.mxu0
  %v647 = vadd.f32 0.0, %v646
  %v648 = vpop.f32.mrf.mxu0
  %649 = vdwg.mxu0
  %v650 = vadd.f32 %v579, %v647
  %s651 = scalar_lea.vmem %s5, 40
  %652 = vst [vmem:[%s651] sm:$0xff] %v650
  %v653 = vtanh.pop %v650
  %s654 = scalar_lea.vmem [#allocation2], 48
  %v655 = vld [vmem:[%s654] sm:$0xff]
  %656 = vmatprep.subr.mxu0 0.0
  %657 = vmatpush1.msra.mxu0 %v198
  %658 = vmatprep.subr.mxu0 0.0
  %659 = vmatpush1.msra.mxu0 %v197
  %660 = vmatprep.subr.mxu0 0.0
  %661 = vmatpush1.msra.mxu0 %v196
  %662 = vmatprep.subr.mxu0 0.0
  %663 = vmatpush1.msra.mxu0 %v195
  %664 = vmatprep.subr.mxu0 0.0
  %665 = vmatpush1.msra.mxu0 %v194
  %666 = vmatprep.subr.mxu0 0.0
  %667 = vmatpush1.msra.mxu0 %v193
  %668 = vmatprep.subr.mxu0 0.0
  %669 = vmatpush1.msra.mxu0 %v192
  %670 = vmatprep.subr.mxu0 0.0
  %671 = vmatpush1.msra.mxu0 %v191
  %672 = vmatprep.subr.mxu0 0.0
  %673 = vmatpush1.msra.mxu0 %v190
  %674 = vmatprep.subr.mxu0 0.0
  %675 = vmatpush1.msra.mxu0 %v189
  %676 = vmatprep.subr.mxu0 0.0
  %677 = vmatpush1.msra.mxu0 %v188
  %678 = vmatprep.subr.mxu0 0.0
  %679 = vmatpush1.msra.mxu0 %v187
  %680 = vmatprep.subr.mxu0 0.0
  %681 = vmatpush1.msra.mxu0 %v186
  %682 = vmatprep.subr.mxu0 0.0
  %683 = vmatpush1.msra.mxu0 %v185
  %684 = vmatprep.subr.mxu0 0.0
  %685 = vmatpush1.msra.mxu0 %v184
  %686 = vmatprep.subr.mxu0 0.0
  %687 = vmatpush1.msra.mxu0 %v183
  %688 = vmatprep.subr.mxu0 0.0
  %689 = vmatpush2.msra.mxu0 0.0
  %690 = vmatprep.subr.mxu0 0.0
  %691 = vmatpush2.msra.mxu0 0.0
  %692 = vmatprep.subr.mxu0 0.0
  %693 = vmatpush2.msra.mxu0 0.0
  %694 = vmatprep.subr.mxu0 0.0
  %695 = vmatpush2.msra.mxu0 0.0
  %696 = vmatprep.subr.mxu0 0.0
  %697 = vmatpush2.msra.mxu0 0.0
  %698 = vmatprep.subr.mxu0 0.0
  %699 = vmatpush2.msra.mxu0 0.0
  %700 = vmatprep.subr.mxu0 0.0
  %701 = vmatpush2.msra.mxu0 0.0
  %702 = vmatprep.subr.mxu0 0.0
  %703 = vmatpush2.msra.mxu0 0.0
  %704 = vmatprep.subr.mxu0 0.0
  %705 = vmatpush2.msra.mxu0 0.0
  %706 = vmatprep.subr.mxu0 0.0
  %707 = vmatpush2.msra.mxu0 0.0
  %708 = vmatprep.subr.mxu0 0.0
  %709 = vmatpush2.msra.mxu0 0.0
  %710 = vmatprep.subr.mxu0 0.0
  %711 = vmatpush2.msra.mxu0 0.0
  %712 = vmatprep.subr.mxu0 0.0
  %713 = vmatpush2.msra.mxu0 0.0
  %714 = vmatprep.subr.mxu0 0.0
  %715 = vmatpush2.msra.mxu0 0.0
  %716 = vmatprep.subr.mxu0 0.0
  %717 = vmatpush2.msra.mxu0 0.0
  %718 = vmatprep.subr.mxu0 0.0
  %719 = vmatpush2.msra.mxu0 0.0
  %720 = vmatprep.mubr.f32.mxu0 0.0
  %721 = vmatmul.mubr.f32.gmra.mxu0 %v653
  %v722 = vpop.f32.mrf.mxu0
  %v723 = vadd.f32 0.0, %v722
  %v724 = vpop.f32.mrf.mxu0
  %725 = vdwg.mxu0
  %v726 = vadd.f32 %v655, %v723
  %s727 = scalar_lea.vmem %s5, 48
  %728 = vst [vmem:[%s727] sm:$0xff] %v726
  %v729 = vtanh.pop %v726
  %s730 = scalar_lea.vmem [#allocation2], 56
  %v731 = vld [vmem:[%s730] sm:$0xff]
  %732 = vmatprep.subr.mxu0 0.0
  %733 = vmatpush1.msra.mxu0 %v198
  %734 = vmatprep.subr.mxu0 0.0
  %735 = vmatpush1.msra.mxu0 %v197
  %736 = vmatprep.subr.mxu0 0.0
  %737 = vmatpush1.msra.mxu0 %v196
  %738 = vmatprep.subr.mxu0 0.0
  %739 = vmatpush1.msra.mxu0 %v195
  %740 = vmatprep.subr.mxu0 0.0
  %741 = vmatpush1.msra.mxu0 %v194
  %742 = vmatprep.subr.mxu0 0.0
  %743 = vmatpush1.msra.mxu0 %v193
  %744 = vmatprep.subr.mxu0 0.0
  %745 = vmatpush1.msra.mxu0 %v192
  %746 = vmatprep.subr.mxu0 0.0
  %747 = vmatpush1.msra.mxu0 %v191
  %748 = vmatprep.subr.mxu0 0.0
  %749 = vmatpush1.msra.mxu0 %v190
  %750 = vmatprep.subr.mxu0 0.0
  %751 = vmatpush1.msra.mxu0 %v189
  %752 = vmatprep.subr.mxu0 0.0
  %753 = vmatpush1.msra.mxu0 %v188
  %754 = vmatprep.subr.mxu0 0.0
  %755 = vmatpush1.msra.mxu0 %v187
  %756 = vmatprep.subr.mxu0 0.0
  %757 = vmatpush1.msra.mxu0 %v186
  %758 = vmatprep.subr.mxu0 0.0
  %759 = vmatpush1.msra.mxu0 %v185
  %760 = vmatprep.subr.mxu0 0.0
  %761 = vmatpush1.msra.mxu0 %v184
  %762 = vmatprep.subr.mxu0 0.0
  %763 = vmatpush1.msra.mxu0 %v183
  %764 = vmatprep.subr.mxu0 0.0
  %765 = vmatpush2.msra.mxu0 0.0
  %766 = vmatprep.subr.mxu0 0.0
  %767 = vmatpush2.msra.mxu0 0.0
  %768 = vmatprep.subr.mxu0 0.0
  %769 = vmatpush2.msra.mxu0 0.0
  %770 = vmatprep.subr.mxu0 0.0
  %771 = vmatpush2.msra.mxu0 0.0
  %772 = vmatprep.subr.mxu0 0.0
  %773 = vmatpush2.msra.mxu0 0.0
  %774 = vmatprep.subr.mxu0 0.0
  %775 = vmatpush2.msra.mxu0 0.0
  %776 = vmatprep.subr.mxu0 0.0
  %777 = vmatpush2.msra.mxu0 0.0
  %778 = vmatprep.subr.mxu0 0.0
  %779 = vmatpush2.msra.mxu0 0.0
  %780 = vmatprep.subr.mxu0 0.0
  %781 = vmatpush2.msra.mxu0 0.0
  %782 = vmatprep.subr.mxu0 0.0
  %783 = vmatpush2.msra.mxu0 0.0
  %784 = vmatprep.subr.mxu0 0.0
  %785 = vmatpush2.msra.mxu0 0.0
  %786 = vmatprep.subr.mxu0 0.0
  %787 = vmatpush2.msra.mxu0 0.0
  %788 = vmatprep.subr.mxu0 0.0
  %789 = vmatpush2.msra.mxu0 0.0
  %790 = vmatprep.subr.mxu0 0.0
  %791 = vmatpush2.msra.mxu0 0.0
  %792 = vmatprep.subr.mxu0 0.0
  %793 = vmatpush2.msra.mxu0 0.0
  %794 = vmatprep.subr.mxu0 0.0
  %795 = vmatpush2.msra.mxu0 0.0
  %796 = vmatprep.mubr.f32.mxu0 0.0
  %797 = vmatmul.mubr.f32.gmra.mxu0 %v729
  %v798 = vpop.f32.mrf.mxu0
  %v799 = vadd.f32 0.0, %v798
  %v800 = vpop.f32.mrf.mxu0
  %801 = vdwg.mxu0
  %v802 = vadd.f32 %v731, %v799
  %s803 = scalar_lea.vmem %s5, 56
  %804 = vst [vmem:[%s803] sm:$0xff] %v802
  %v805 = vtanh.pop %v802
  %806 = vst [vmem:[%s6] sm:$0xff] %v805
  %v807 = vld [vmem:[%s5] sm:$0xff]
  %v808 = vld [vmem:[%s5 + $0x8] sm:$0xff]
  %v809 = vld [vmem:[%s5 + $0x10] sm:$0xff]
  %v810 = vld [vmem:[%s5 + $0x18] sm:$0xff]
  %v811 = vld [vmem:[%s5 + $0x20] sm:$0xff]
  %v812 = vld [vmem:[%s5 + $0x28] sm:$0xff]
  %v813 = vld [vmem:[%s5 + $0x30] sm:$0xff]
  %v814 = vld [vmem:[%s5 + $0x38] sm:$0xff]
  %v815 = vlaneseq
  %v816 = vand.u32 %v815, 127
  %vm817 = vcmp.ge.s32.totalorder %v816, 32
  %vm818 = vcmp.lt.s32.totalorder %v816, 40
  %vm819 = vmand %vm817, %vm818
  %v820 = vsel %vm819, %v807, -inf
  %v821 = vsel %vm819, %v808, -inf
  %v822 = vsel %vm819, %v809, -inf
  %v823 = vsel %vm819, %v810, -inf
  %v824 = vsel %vm819, %v811, -inf
  %v825 = vsel %vm819, %v812, -inf
  %v826 = vsel %vm819, %v813, -inf
  %v827 = vsel %vm819, %v814, -inf
  %828 = vmax.xlane.f32.xlu0 %v820
  %v829 = vpop.xlane.xlu0 %828
  %830 = vmax.xlane.f32.xlu0 %v821
  %v831 = vpop.xlane.xlu0 %830
  %832 = vmax.xlane.f32.xlu0 %v822
  %v833 = vpop.xlane.xlu0 %832
  %834 = vmax.xlane.f32.xlu0 %v823
  %v835 = vpop.xlane.xlu0 %834
  %836 = vmax.xlane.f32.xlu0 %v824
  %v837 = vpop.xlane.xlu0 %836
  %838 = vmax.xlane.f32.xlu0 %v825
  %v839 = vpop.xlane.xlu0 %838
  %840 = vmax.xlane.f32.xlu0 %v826
  %v841 = vpop.xlane.xlu0 %840
  %842 = vmax.xlane.f32.xlu0 %v827
  %v843 = vpop.xlane.xlu0 %842
  %v844 = vsub.f32 %v820, %v829
  %v845 = vsub.f32 %v821, %v831
  %v846 = vsub.f32 %v822, %v833
  %v847 = vsub.f32 %v823, %v835
  %v848 = vsub.f32 %v824, %v837
  %v849 = vsub.f32 %v825, %v839
  %v850 = vsub.f32 %v826, %v841
  %v851 = vsub.f32 %v827, %v843
  %v852 = vmul.f32 %v844, 1.442695
  %v853 = vpow.pop %v852
  %v854 = vmul.f32 %v845, 1.442695
  %v855 = vpow.pop %v854
  %v856 = vmul.f32 %v846, 1.442695
  %v857 = vpow.pop %v856
  %v858 = vmul.f32 %v847, 1.442695
  %v859 = vpow.pop %v858
  %v860 = vmul.f32 %v848, 1.442695
  %v861 = vpow.pop %v860
  %v862 = vmul.f32 %v849, 1.442695
  %v863 = vpow.pop %v862
  %v864 = vmul.f32 %v850, 1.442695
  %v865 = vpow.pop %v864
  %v866 = vmul.f32 %v851, 1.442695
  %v867 = vpow.pop %v866
  %868 = vadd.xlane.f32.xlu0 %v853
  %v869 = vpop.xlane.xlu0 %868
  %870 = vadd.xlane.f32.xlu0 %v855
  %v871 = vpop.xlane.xlu0 %870
  %872 = vadd.xlane.f32.xlu0 %v857
  %v873 = vpop.xlane.xlu0 %872
  %874 = vadd.xlane.f32.xlu0 %v859
  %v875 = vpop.xlane.xlu0 %874
  %876 = vadd.xlane.f32.xlu0 %v861
  %v877 = vpop.xlane.xlu0 %876
  %878 = vadd.xlane.f32.xlu0 %v863
  %v879 = vpop.xlane.xlu0 %878
  %880 = vadd.xlane.f32.xlu0 %v865
  %v881 = vpop.xlane.xlu0 %880
  %882 = vadd.xlane.f32.xlu0 %v867
  %v883 = vpop.xlane.xlu0 %882
  %v884 = vsub.f32 %v807, %v829
  %v885 = vsub.f32 %v808, %v831
  %v886 = vsub.f32 %v809, %v833
  %v887 = vsub.f32 %v810, %v835
  %v888 = vsub.f32 %v811, %v837
  %v889 = vsub.f32 %v812, %v839
  %v890 = vsub.f32 %v813, %v841
  %v891 = vsub.f32 %v814, %v843
  %v892 = vlog2.pop %v869
  %v893 = vmul.f32 %v892, 0.6931472
  %v894 = vlog2.pop %v871
  %v895 = vmul.f32 %v894, 0.6931472
  %v896 = vlog2.pop %v873
  %v897 = vmul.f32 %v896, 0.6931472
  %v898 = vlog2.pop %v875
  %v899 = vmul.f32 %v898, 0.6931472
  %v900 = vlog2.pop %v877
  %v901 = vmul.f32 %v900, 0.6931472
  %v902 = vlog2.pop %v879
  %v903 = vmul.f32 %v902, 0.6931472
  %v904 = vlog2.pop %v881
  %v905 = vmul.f32 %v904, 0.6931472
  %v906 = vlog2.pop %v883
  %v907 = vmul.f32 %v906, 0.6931472
  %v908 = vsub.f32 %v884, %v893
  %v909 = vsub.f32 %v885, %v895
  %v910 = vsub.f32 %v886, %v897
  %v911 = vsub.f32 %v887, %v899
  %v912 = vsub.f32 %v888, %v901
  %v913 = vsub.f32 %v889, %v903
  %v914 = vsub.f32 %v890, %v905
  %v915 = vsub.f32 %v891, %v907
  %916 = vst [vmem:[%s5] sm:$0xff] %v908
  %917 = vst [vmem:[%s5 + $0x8] sm:$0xff] %v909
  %918 = vst [vmem:[%s5 + $0x10] sm:$0xff] %v910
  %919 = vst [vmem:[%s5 + $0x18] sm:$0xff] %v911
  %920 = vst [vmem:[%s5 + $0x20] sm:$0xff] %v912
  %921 = vst [vmem:[%s5 + $0x28] sm:$0xff] %v913
  %922 = vst [vmem:[%s5 + $0x30] sm:$0xff] %v914
  %923 = vst [vmem:[%s5 + $0x38] sm:$0xff] %v915
  // Predicated region
  $region26: #{rnn_sequence_forward.1} parent=0 // pred_check
    _
  $region27: #{rnn_sequence_forward.1} parent=0 // pred_check_branch
    %925 = sbr.rel (0) target = $region29
  $region28: #{rnn_sequence_forward.1} parent=0 // pred_region
    _
  $region29: #{rnn_sequence_forward.1} parent=0 // pred_fallthru
    _
  // Predicated region
  $region30: #{rnn_sequence_forward.1} parent=0 // pred_check
    _
  $region31: #{rnn_sequence_forward.1} parent=0 // pred_check_branch
    %927 = sbr.rel (0) target = $region33
  $region32: #{rnn_sequence_forward.1} parent=0 // pred_region
    _
  $region33: #{rnn_sequence_forward.1} parent=0 // pred_fallthru
    _
  // Predicated region
  $region34: #{rnn_sequence_forward.1} parent=0 // pred_check
    _
  $region35: #{rnn_sequence_forward.1} parent=0 // pred_check_branch
    %929 = sbr.rel (0) target = $region37
  $region36: #{rnn_sequence_forward.1} parent=0 // pred_region
    _
  $region37: #{rnn_sequence_forward.1} parent=0 // pred_fallthru
    _
  // Predicated region
  $region38: #{rnn_sequence_forward.1} parent=0 // pred_check
    _
  $region39: #{rnn_sequence_forward.1} parent=0 // pred_check_branch
    %931 = sbr.rel (0) target = $region41
  $region40: #{rnn_sequence_forward.1} parent=0 // pred_region
    _
  $region41: #{rnn_sequence_forward.1} parent=0 // pred_fallthru
    _

</llo_original>
